<compile_context>
chip_gen: v5e
topology: v5e:2x2
jax: 0.10.0
libtpu: 0.0.40
codegen_flags: <defaults>
</compile_context>

<pallas_src>
import functools

import jax
import jax.numpy as jnp
from jax.experimental import pallas as pl
from jax.experimental.pallas import tpu as pltpu


def _round_up(x: int, m: int) -> int:
    return (x + m - 1) // m * m


def _divisor_tile(n: int, want: int, step: int) -> int:
    """Largest multiple of `step` that is <= min(want, n) and divides n."""
    best = step
    t = step
    lim = min(want, n)
    while t <= lim:
        if n % t == 0:
            best = t
        t += step
    return best


def _physical_vmem_bytes() -> int:
    try:
        return int(pltpu.get_tpu_info().vmem_capacity_bytes)
    except Exception:
        return 64 * 1024 * 1024          # conservative (v7x-sized) fallback


# Per-generation scoped-VMEM limit: ~56 MiB on v7x (64 MiB physical),
# ~96 MiB on v5e/v6e (128 MiB physical).
_VMEM_LIMIT = int(min(_physical_vmem_bytes() - 8 * 1024 * 1024,
                      96 * 1024 * 1024))


def mlp_kernel(x_ref, w1t_ref, b1_ref, w2t_ref, b2_ref, o_ref, acc_ref):
    # x_ref  : (tile_m, Ep)      token tile
    # w1t_ref: (Ep, tile_h)      slice of W1.T
    # b1_ref : (1, tile_h)  f32  slice of b1
    # w2t_ref: (tile_h, Ep)      slice of W2.T
    # b2_ref : (1, Ep)      f32  full b2
    # o_ref  : (tile_m, Ep)      output tile (resident across the H axis)
    # acc_ref: (tile_m, Ep) f32  accumulator scratch
    k = pl.program_id(1)

    # fc1 partial: (tile_m, tile_h), f32 accumulation on the MXU.
    h = jnp.dot(x_ref[...], w1t_ref[...], preferred_element_type=jnp.float32)
    h = h + b1_ref[...]

    # Exact GELU (erf form), f32 epilogue — same as torch.nn.GELU() default.
    # TODO(synk): tanh-approx GELU would hit the EUP slot (v5e VALU relief) but
    # deviates from torch.nn.GELU() exact numerics, so it stays erf.
    h = 0.5 * h * (1.0 + jax.lax.erf(h * jnp.float32(0.7071067811865476)))

    # fc2 partial: this H-slice's contribution to the (tile_m, Ep) output.
    partial = jnp.dot(h.astype(w2t_ref.dtype), w2t_ref[...],
                      preferred_element_type=jnp.float32)

    # First-iteration write (no zero-init pass), accumulate afterwards.
    @pl.when(k == 0)
    def _():
        acc_ref[...] = partial

    @pl.when(k > 0)
    def _():
        acc_ref[...] += partial

    @pl.when(k == pl.num_programs(1) - 1)
    def _():
        o_ref[...] = (acc_ref[...] + b2_ref[...]).astype(o_ref.dtype)


def prepare_mlp_params(w1, b1, w2, b2, *, compute_dtype=jnp.bfloat16):
    """One-time parameter prep (hoisted out of the forward path).

    PyTorch nn.Linear convention: w1 (H, E), w2 (E, H).
    Returns pre-transposed, lane-padded weights in MXU-friendly (K, N) layout
    and f32 padded biases.
    """
    H, E = w1.shape
    Ep = _round_up(E, 128)
    Hp = _round_up(H, 128)
    w1t = jnp.pad(w1.T.astype(compute_dtype), ((0, Ep - E), (0, Hp - H)))  # (Ep, Hp)
    w2t = jnp.pad(w2.T.astype(compute_dtype), ((0, Hp - H), (0, Ep - E)))  # (Hp, Ep)
    b1p = jnp.pad(b1.astype(jnp.float32), (0, Hp - H)).reshape(1, Hp)
    b2p = jnp.pad(b2.astype(jnp.float32), (0, Ep - E)).reshape(1, Ep)
    return w1t, b1p, w2t, b2p


@functools.partial(jax.jit,
                   static_argnames=("tile_m", "tile_h", "weight_buffers"))
def mlp_forward_prepared(x, w1t, b1p, w2t, b2p, *,
                         tile_m=1024, tile_h=512, weight_buffers=2):
    # x : (B, S, E); weights already prepared via prepare_mlp_params().
    B, S, E = x.shape
    M = B * S
    Ep, Hp = w1t.shape
    assert w2t.shape == (Hp, Ep), "w2t must be (Hp, Ep) from prepare_mlp_params"

    cdt = w1t.dtype                      # matmul compute dtype (bf16 by default)
    out_dt = x.dtype
    cb = jnp.dtype(cdt).itemsize
    ob = jnp.dtype(out_dt).itemsize

    # Lane-divisible hidden tile (derived from Hp, consistent with prepare).
    tile_h = _divisor_tile(Hp, tile_h, 128)

    # Sublane packing: bf16 packs (16, 128) per vreg, f32 packs (8, 128).
    pack = 16 if cb == 2 else 8

    # Clamp tile_m to the actual problem size (don't over-pad tiny inputs).
    tile_m = max(pack, min(tile_m, _round_up(M, pack)))

    # Clamp tile_m to the per-generation VMEM budget (double-buffered x/out,
    # weight slices, plus the f32 accumulator).
    def _vmem_needed(tm):
        return (2 * tm * Ep * cb            # x (double-buffered)
                + 2 * tm * Ep * ob          # out (double-buffered)
                + tm * Ep * 4               # f32 accumulator
                + 2 * Ep * tile_h * cb      # W1.T slice
                + 2 * tile_h * Ep * cb      # W2.T slice
                + 4 * 4 * (tile_h + Ep))    # biases (padded)
    while _vmem_needed(tile_m) > (_VMEM_LIMIT * 8) // 10 and tile_m > pack:
        tile_m = max(pack, _round_up(tile_m // 2, pack))
    Mp = _round_up(M, tile_m)

    # Keep >= 2 M tiles so the "parallel" axis feeds both v7x TensorCores
    # (harmless on single-TC chips; don't shrink below 128 rows).
    while Mp // tile_m < 2 and tile_m > max(pack, 128):
        tile_m = max(pack, _round_up(tile_m // 2, pack))
        Mp = _round_up(M, tile_m)

    x2d = jnp.pad(x.reshape(M, E).astype(cdt), ((0, Mp - M), (0, Ep - E)))

    m_tiles = Mp // tile_m
    h_tiles = Hp // tile_h
    cost = pl.CostEstimate(
        flops=4 * Mp * Ep * Hp,                         # fc1 + fc2
        transcendentals=Mp * Hp,                        # erf per hidden activation
        bytes_accessed=(x2d.size * cb                               # x, once
                        + (w1t.size + w2t.size) * cb * m_tiles      # weights re-streamed per M tile
                        + (b1p.size + b2p.size) * 4 * m_tiles
                        + Mp * Ep * ob),                            # output, once
    )

    # Optional deeper buffering on the weight streams (profile-gated).
    w_kwargs = {}
    if weight_buffers > 2:
        w_kwargs = dict(pipeline_mode=pl.Buffered(weight_buffers))

    out = pl.pallas_call(
        mlp_kernel,
        out_shape=jax.ShapeDtypeStruct((Mp, Ep), out_dt),
        grid_spec=pltpu.PrefetchScalarGridSpec(
            num_scalar_prefetch=0,
            grid=(m_tiles, h_tiles),
            in_specs=[
                pl.BlockSpec((tile_m, Ep), lambda i, k: (i, 0)),             # x tile
                pl.BlockSpec((Ep, tile_h), lambda i, k: (0, k), **w_kwargs),  # W1.T slice
                pl.BlockSpec((1, tile_h), lambda i, k: (0, k)),              # b1 slice
                pl.BlockSpec((tile_h, Ep), lambda i, k: (k, 0), **w_kwargs),  # W2.T slice
                pl.BlockSpec((1, Ep), lambda i, k: (0, 0)),                  # b2 (full)
            ],
            out_specs=pl.BlockSpec((tile_m, Ep), lambda i, k: (i, 0)),
            scratch_shapes=[pltpu.VMEM((tile_m, Ep), jnp.float32)],
        ),
        compiler_params=pltpu.CompilerParams(
            dimension_semantics=("parallel", "arbitrary"),
            vmem_limit_bytes=_VMEM_LIMIT,
        ),
        cost_estimate=cost,
    )(x2d, w1t, b1p, w2t, b2p)

    return out[:M, :E].reshape(B, S, E)


def mlp_forward(x, w1, b1, w2, b2, *, tile_m=1024, tile_h=512,
                compute_dtype=jnp.bfloat16, weight_buffers=2):
    """Convenience one-shot wrapper. For repeated calls, run
    prepare_mlp_params() once and call mlp_forward_prepared() directly."""
    params = prepare_mlp_params(w1, b1, w2, b2, compute_dtype=compute_dtype)
    return mlp_forward_prepared(x, *params, tile_m=tile_m, tile_h=tile_h,
                                weight_buffers=weight_buffers)


def mlp_reference(x, w1, b1, w2, b2):
    h = jnp.einsum("bse,he->bsh", x, w1) + b1
    h = jax.nn.gelu(h, approximate=False)
    y = jnp.einsum("bsh,eh->bse", h, w2) + b2
    return y


if __name__ == "__main__":
    batch, seq, embed_dim, hidden_dim = 2, 8, 32, 64

    key = jax.random.PRNGKey(0)
    kx, kw1, kb1, kw2, kb2 = jax.random.split(key, 5)

    x = jax.random.normal(kx, (batch, seq, embed_dim), dtype=jnp.float32)
    # PyTorch nn.Linear weight shape: (out_features, in_features)
    w1 = jax.random.normal(kw1, (hidden_dim, embed_dim), dtype=jnp.float32) * 0.1
    b1 = jax.random.normal(kb1, (hidden_dim,), dtype=jnp.float32) * 0.1
    w2 = jax.random.normal(kw2, (embed_dim, hidden_dim), dtype=jnp.float32) * 0.1
    b2 = jax.random.normal(kb2, (embed_dim,), dtype=jnp.float32) * 0.1

    ref = mlp_reference(x, w1, b1, w2, b2)

    # --- default production path: bf16 matmul operands, f32 accumulation ---
    params_bf16 = prepare_mlp_params(w1, b1, w2, b2, compute_dtype=jnp.bfloat16)
    out_bf16 = mlp_forward_prepared(x, *params_bf16, tile_m=1024, tile_h=512)
    out_bf16 = jax.block_until_ready(out_bf16)
    assert out_bf16.shape == (batch, seq, embed_dim)
    assert jnp.allclose(out_bf16, ref, atol=5e-2, rtol=5e-2), "bf16 path mismatch vs reference"

    # --- exact f32 path (tight-tolerance numerics check) ---
    params_f32 = prepare_mlp_params(w1, b1, w2, b2, compute_dtype=jnp.float32)
    out_f32 = mlp_forward_prepared(x, *params_f32, tile_m=1024, tile_h=512)
    out_f32 = jax.block_until_ready(out_f32)
    assert jnp.allclose(out_f32, ref, atol=1e-5, rtol=1e-5), "f32 path mismatch vs reference"

    print("KERNEL_OK")
</pallas_src>

<mosaic_0001>
module attributes {stable_mosaic.version = 11 : i64} {
  func.func @mlp_kernel(%arg0: i32, %arg1: i32, %arg2: memref<16x128xbf16, #tpu.memory_space<vmem>>, %arg3: memref<128x128xbf16, #tpu.memory_space<vmem>>, %arg4: memref<1x128xf32, #tpu.memory_space<vmem>>, %arg5: memref<128x128xbf16, #tpu.memory_space<vmem>>, %arg6: memref<1x128xf32, #tpu.memory_space<vmem>>, %arg7: memref<16x128xf32, #tpu.memory_space<vmem>>, %arg8: memref<16x128xf32, #tpu.memory_space<vmem>>) attributes {dimension_semantics = [#tpu.dimension_semantics<parallel>, #tpu.dimension_semantics<arbitrary>], iteration_bounds = array<i64: 1, 1>, scalar_prefetch = 0 : i64, scratch_operands = 1 : i64, tpu.core_type = #tpu.core_type<tc>, window_params = [{transform_indices = @transform_0, window_bounds = array<i64: 16, 128>}, {transform_indices = @transform_1, window_bounds = array<i64: 128, 128>}, {transform_indices = @transform_2, window_bounds = array<i64: 1, 128>}, {transform_indices = @transform_3, window_bounds = array<i64: 128, 128>}, {pipeline_mode = #tpu.pipeline_mode<synchronous>, transform_indices = @transform_4, window_bounds = array<i64: 1, 128>}, {transform_indices = @transform_5, window_bounds = array<i64: 16, 128>}]} {
    %c0 = arith.constant 0 : index
    %c0_0 = arith.constant 0 : index
    %0 = vector.load %arg2[%c0, %c0_0] : memref<16x128xbf16, #tpu.memory_space<vmem>>, vector<16x128xbf16>
    %c0_1 = arith.constant 0 : index
    %c0_2 = arith.constant 0 : index
    %1 = vector.load %arg3[%c0_1, %c0_2] : memref<128x128xbf16, #tpu.memory_space<vmem>>, vector<128x128xbf16>
    %cst = arith.constant dense<0.000000e+00> : vector<16x128xf32>
    %2 = tpu.matmul %0, %1, %cst {dimension_numbers = #tpu.dot_dimension_numbers<[1], [0], [0], [1], [0, 0, 1, 1], [], []>} : vector<16x128xbf16>, vector<128x128xbf16>, vector<16x128xf32> -> vector<16x128xf32>
    %c0_3 = arith.constant 0 : index
    %c0_4 = arith.constant 0 : index
    %3 = vector.load %arg4[%c0_3, %c0_4] : memref<1x128xf32, #tpu.memory_space<vmem>>, vector<1x128xf32>
    %4 = vector.broadcast %3 : vector<1x128xf32> to vector<16x128xf32>
    %5 = arith.addf %2, %4 : vector<16x128xf32>
    %cst_5 = arith.constant 5.000000e-01 : f32
    %6 = vector.broadcast %cst_5 : f32 to vector<16x128xf32>
    %7 = arith.mulf %6, %5 : vector<16x128xf32>
    %cst_6 = arith.constant 0.707106769 : f32
    %8 = vector.broadcast %cst_6 : f32 to vector<16x128xf32>
    %9 = arith.mulf %5, %8 : vector<16x128xf32>
    %10 = math.erf %9 : vector<16x128xf32>
    %cst_7 = arith.constant 1.000000e+00 : f32
    %11 = vector.broadcast %cst_7 : f32 to vector<16x128xf32>
    %12 = arith.addf %11, %10 : vector<16x128xf32>
    %13 = arith.mulf %7, %12 : vector<16x128xf32>
    %14 = arith.truncf %13 : vector<16x128xf32> to vector<16x128xbf16>
    %c0_8 = arith.constant 0 : index
    %c0_9 = arith.constant 0 : index
    %15 = vector.load %arg5[%c0_8, %c0_9] : memref<128x128xbf16, #tpu.memory_space<vmem>>, vector<128x128xbf16>
    %cst_10 = arith.constant dense<0.000000e+00> : vector<16x128xf32>
    %16 = tpu.matmul %14, %15, %cst_10 {dimension_numbers = #tpu.dot_dimension_numbers<[1], [0], [0], [1], [0, 0, 1, 1], [], []>} : vector<16x128xbf16>, vector<128x128xbf16>, vector<16x128xf32> -> vector<16x128xf32>
    %c0_i32 = arith.constant 0 : i32
    %17 = arith.cmpi eq, %arg1, %c0_i32 : i32
    %18 = arith.extui %17 : i1 to i32
    %c0_i32_11 = arith.constant 0 : i32
    %19 = arith.cmpi ne, %18, %c0_i32_11 : i32
    scf.if %19 {
      %c0_16 = arith.constant 0 : index
      %c0_17 = arith.constant 0 : index
      %26 = vector.load %arg8[%c0_16, %c0_17] : memref<16x128xf32, #tpu.memory_space<vmem>>, vector<16x128xf32>
      tpu.vector_store %arg8[%c0_16, %c0_17], %16 {strides = array<i32>} : memref<16x128xf32, #tpu.memory_space<vmem>>, vector<16x128xf32>,
    } else {
    }
    %c0_i32_12 = arith.constant 0 : i32
    %20 = arith.cmpi sgt, %arg1, %c0_i32_12 : i32
    %21 = arith.extui %20 : i1 to i32
    %c0_i32_13 = arith.constant 0 : i32
    %22 = arith.cmpi ne, %21, %c0_i32_13 : i32
    scf.if %22 {
      %c0_16 = arith.constant 0 : index
      %c0_17 = arith.constant 0 : index
      %26 = vector.load %arg8[%c0_16, %c0_17] : memref<16x128xf32, #tpu.memory_space<vmem>>, vector<16x128xf32>
      %27 = arith.addf %26, %16 : vector<16x128xf32>
      %c0_18 = arith.constant 0 : index
      %c0_19 = arith.constant 0 : index
      %28 = vector.load %arg8[%c0_18, %c0_19] : memref<16x128xf32, #tpu.memory_space<vmem>>, vector<16x128xf32>
      tpu.vector_store %arg8[%c0_18, %c0_19], %27 {strides = array<i32>} : memref<16x128xf32, #tpu.memory_space<vmem>>, vector<16x128xf32>,
    } else {
    }
    %c0_i32_14 = arith.constant 0 : i32
    %23 = arith.cmpi eq, %arg1, %c0_i32_14 : i32
    %24 = arith.extui %23 : i1 to i32
    %c0_i32_15 = arith.constant 0 : i32
    %25 = arith.cmpi ne, %24, %c0_i32_15 : i32
    scf.if %25 {
      %c0_16 = arith.constant 0 : index
      %c0_17 = arith.constant 0 : index
      %26 = vector.load %arg8[%c0_16, %c0_17] : memref<16x128xf32, #tpu.memory_space<vmem>>, vector<16x128xf32>
      %c0_18 = arith.constant 0 : index
      %c0_19 = arith.constant 0 : index
      %27 = vector.load %arg6[%c0_18, %c0_19] : memref<1x128xf32, #tpu.memory_space<vmem>>, vector<1x128xf32>
      %28 = vector.broadcast %27 : vector<1x128xf32> to vector<16x128xf32>
      %29 = arith.addf %26, %28 : vector<16x128xf32>
      %c0_20 = arith.constant 0 : index
      %c0_21 = arith.constant 0 : index
      %30 = vector.load %arg7[%c0_20, %c0_21] : memref<16x128xf32, #tpu.memory_space<vmem>>, vector<16x128xf32>
      tpu.vector_store %arg7[%c0_20, %c0_21], %29 {strides = array<i32>} : memref<16x128xf32, #tpu.memory_space<vmem>>, vector<16x128xf32>,
    } else {
    }
    return
  }
  func.func @transform_0(%arg0: i32, %arg1: i32) -> (i32, i32) {
    %c0_i32 = arith.constant 0 : i32
    %c0_i32_0 = arith.constant 0 : i32
    return %arg0, %c0_i32 : i32, i32
  }
  func.func @transform_1(%arg0: i32, %arg1: i32) -> (i32, i32) {
    %c0_i32 = arith.constant 0 : i32
    %c0_i32_0 = arith.constant 0 : i32
    return %c0_i32, %arg1 : i32, i32
  }
  func.func @transform_2(%arg0: i32, %arg1: i32) -> (i32, i32) {
    %c0_i32 = arith.constant 0 : i32
    %c0_i32_0 = arith.constant 0 : i32
    return %c0_i32, %arg1 : i32, i32
  }
  func.func @transform_3(%arg0: i32, %arg1: i32) -> (i32, i32) {
    %c0_i32 = arith.constant 0 : i32
    %c0_i32_0 = arith.constant 0 : i32
    return %arg1, %c0_i32 : i32, i32
  }
  func.func @transform_4(%arg0: i32, %arg1: i32) -> (i32, i32) {
    %c0_i32 = arith.constant 0 : i32
    %c0_i32_0 = arith.constant 0 : i32
    %c0_i32_1 = arith.constant 0 : i32
    return %c0_i32, %c0_i32_0 : i32, i32
  }
  func.func @transform_5(%arg0: i32, %arg1: i32) -> (i32, i32) {
    %c0_i32 = arith.constant 0 : i32
    %c0_i32_0 = arith.constant 0 : i32
    return %arg0, %c0_i32 : i32, i32
  }
}

</mosaic_0001>

<llo_original>
// kernel: mlp_forward_prepared.1
$region0: #{mlp_forward_prepared.1}
  #allocation0 [shape = 'u32[]', space=smem, size = 0x4, offset = 0x4, fixed_abs, tag = 'smem constant byte address 0x4 - core index']
  #allocation1 [shape = 'u32[72,128]{1,0:T(1,128)}', space=vmem, size = 0x9000, scoped, tag = 'internal scratch']
  #allocation2 [shape = 'f32[16,128]{1,0:T(8,128)}', space=vmem, size = 0x2000, scoped, tag = 'scratch operand']
  %s0 = inlined_call_operand.vmem [shape: bf16[16,128], index: 0, kind: input, shape index: {}]
  %s1 = inlined_call_operand.hbm [shape: bf16[128,128], index: 1, kind: input, shape index: {}]
  %s2 = inlined_call_operand.vmem [shape: f32[1,128], index: 2, kind: input, shape index: {}]
  %s3 = inlined_call_operand.hbm [shape: bf16[128,128], index: 3, kind: input, shape index: {}]
  %s4 = inlined_call_operand.vmem [shape: f32[1,128], index: 4, kind: input, shape index: {}]
  %s5 = inlined_call_operand.vmem [shape: f32[16,128], index: 5, kind: output, shape index: {}]
  %s6 = sld [smem:[#allocation0]]
  $region50: #{mlp_forward_prepared.1} parent=0
    _
  %s8 = ssub.s32 1, %s6
  %s9 = scalar_select 0, %s8, %s6
  $region1: #{mlp_forward_prepared.1} parent=0
    #allocation3 [shape = 'u8[32768]{0}', space=vmem, size = 0x8000, scoped, tag = 'input window, operand 1, single buffered']
    #allocation4 [shape = 's32[1]{0}', space=sflag, size = 0x4, scoped, tag = 'scoped memory for mlp_forward_prepared.1']
    #allocation5 [shape = 'u8[32768]{0}', space=vmem, size = 0x8000, scoped, tag = 'input window, operand 3, single buffered']
    #allocation6 [shape = 's32[1]{0}', space=sflag, size = 0x4, scoped, tag = 'scoped memory for mlp_forward_prepared.1']
    %10 = vsyncpa [#allocation4], 0
    %11 = vsyncpa [#allocation6], 0
    // Predicated region
    $region2: #{mlp_forward_prepared.1} parent=1 // pred_check
      _
    $region3: #{mlp_forward_prepared.1} parent=1 // pred_check_branch
      %13 = sbr.rel (0) target = $region5
    $region4: #{mlp_forward_prepared.1} parent=1 // pred_region
      _
    $region5: #{mlp_forward_prepared.1} parent=1 // pred_fallthru
      _
    // Predicated region
    $region6: #{mlp_forward_prepared.1} parent=1 // pred_check
      _
    $region7: #{mlp_forward_prepared.1} parent=1 // pred_check_branch
      %15 = sbr.rel (0) target = $region9
    $region8: #{mlp_forward_prepared.1} parent=1 // pred_region
      %17 = vsyncadd [#allocation4], 0
      %s18 = sshll.u32 %s1, 4
      %s19 = int_to_ptr.hbm [resolvable:$true] %s18
      %s20 = sshll.u32 [#allocation3], 4
      %s21 = int_to_ptr.vmem [resolvable:$true] %s20
      %26 = dma.hbm_to_vmem [thread:$0]  %s19, 1024, %s21, [#allocation4], 64, 64, 4
    $region9: #{mlp_forward_prepared.1} parent=1 // pred_fallthru
      _
    // Predicated region
    $region10: #{mlp_forward_prepared.1} parent=1 // pred_check
      _
    $region11: #{mlp_forward_prepared.1} parent=1 // pred_check_branch
      %28 = sbr.rel (0) target = $region13
    $region12: #{mlp_forward_prepared.1} parent=1 // pred_region
      _
    $region13: #{mlp_forward_prepared.1} parent=1 // pred_fallthru
      _
    // Predicated region
    $region14: #{mlp_forward_prepared.1} parent=1 // pred_check
      _
    $region15: #{mlp_forward_prepared.1} parent=1 // pred_check_branch
      %30 = sbr.rel (0) target = $region17
    $region16: #{mlp_forward_prepared.1} parent=1 // pred_region
      %32 = vsyncadd [#allocation6], 0
      %s33 = sshll.u32 %s3, 4
      %s34 = int_to_ptr.hbm [resolvable:$true] %s33
      %s35 = sshll.u32 [#allocation5], 4
      %s36 = int_to_ptr.vmem [resolvable:$true] %s35
      %41 = dma.hbm_to_vmem [thread:$0]  %s34, 1024, %s36, [#allocation6], 64, 64, 4
    $region17: #{mlp_forward_prepared.1} parent=1 // pred_fallthru
      _
    // Predicated region
    $region18: #{mlp_forward_prepared.1} parent=1 // pred_check
      _
    $region19: #{mlp_forward_prepared.1} parent=1 // pred_check_branch
      %43 = sbr.rel (0) target = $region21
    $region20: #{mlp_forward_prepared.1} parent=1 // pred_region
      _
    $region21: #{mlp_forward_prepared.1} parent=1 // pred_fallthru
      _
    // Predicated region
    $region22: #{mlp_forward_prepared.1} parent=1 // pred_check
      _
    $region23: #{mlp_forward_prepared.1} parent=1 // pred_check_branch
      %45 = sbr.rel (0) target = $region25
    $region24: #{mlp_forward_prepared.1} parent=1 // pred_region
      %47 = dma.done [#allocation4], 1024
    $region25: #{mlp_forward_prepared.1} parent=1 // pred_fallthru
      _
    // Predicated region
    $region26: #{mlp_forward_prepared.1} parent=1 // pred_check
      _
    $region27: #{mlp_forward_prepared.1} parent=1 // pred_check_branch
      %49 = sbr.rel (0) target = $region29
    $region28: #{mlp_forward_prepared.1} parent=1 // pred_region
      %51 = dma.done [#allocation6], 1024
    $region29: #{mlp_forward_prepared.1} parent=1 // pred_fallthru
      _
    %v52 = vld [vmem:[%s0] sm:$0xf]
    %v53 = vld [vmem:[%s0 + $0x4] sm:$0xf]
    %v54 = vld [vmem:[#allocation3] sm:$0xf]
    %v55 = vld [vmem:[#allocation3 + $0x4] sm:$0xf]
    %v56 = vld [vmem:[#allocation3 + $0x8] sm:$0xf]
    %v57 = vld [vmem:[#allocation3 + $0xc] sm:$0xf]
    %v58 = vld [vmem:[#allocation3 + $0x10] sm:$0xf]
    %v59 = vld [vmem:[#allocation3 + $0x14] sm:$0xf]
    %v60 = vld [vmem:[#allocation3 + $0x18] sm:$0xf]
    %v61 = vld [vmem:[#allocation3 + $0x1c] sm:$0xf]
    %v62 = vld [vmem:[#allocation3 + $0x20] sm:$0xf]
    %v63 = vld [vmem:[#allocation3 + $0x24] sm:$0xf]
    %v64 = vld [vmem:[#allocation3 + $0x28] sm:$0xf]
    %v65 = vld [vmem:[#allocation3 + $0x2c] sm:$0xf]
    %v66 = vld [vmem:[#allocation3 + $0x30] sm:$0xf]
    %v67 = vld [vmem:[#allocation3 + $0x34] sm:$0xf]
    %v68 = vld [vmem:[#allocation3 + $0x38] sm:$0xf]
    %v69 = vld [vmem:[#allocation3 + $0x3c] sm:$0xf]
    %v70 = vld [vmem:[%s2] sm:$0x1]
    %v72 = vperm.slane %v70, 0
    %v76 = vunpack.c.l.b16 %v52
    %v77 = vunpack.c.l.b16 %v53
    %v78 = vpack.c.b16 %v77, %v76
    %v96 = vunpack.c.l.b16 %v54
    %v97 = vunpack.c.l.b16 %v55
    %v98 = vunpack.c.l.b16 %v56
    %v99 = vunpack.c.l.b16 %v57
    %v100 = vunpack.c.l.b16 %v58
    %v101 = vunpack.c.l.b16 %v59
    %v102 = vunpack.c.l.b16 %v60
    %v103 = vunpack.c.l.b16 %v61
    %v104 = vunpack.c.l.b16 %v62
    %v105 = vunpack.c.l.b16 %v63
    %v106 = vunpack.c.l.b16 %v64
    %v107 = vunpack.c.l.b16 %v65
    %v108 = vunpack.c.l.b16 %v66
    %v109 = vunpack.c.l.b16 %v67
    %v110 = vunpack.c.l.b16 %v68
    %v111 = vunpack.c.l.b16 %v69
    %v112 = vpack.c.b16 %v97, %v96
    %v113 = vpack.c.b16 %v99, %v98
    %v114 = vpack.c.b16 %v101, %v100
    %v115 = vpack.c.b16 %v103, %v102
    %v116 = vpack.c.b16 %v105, %v104
    %v117 = vpack.c.b16 %v107, %v106
    %v118 = vpack.c.b16 %v109, %v108
    %v119 = vpack.c.b16 %v111, %v110
    %128 = vmatpush.bf16.msra.mxu0 %v119
    %129 = vmatpush.bf16.msra.mxu0 %v118
    %130 = vmatpush.bf16.msra.mxu0 %v117
    %131 = vmatpush.bf16.msra.mxu0 %v116
    %132 = vmatpush.bf16.msra.mxu0 %v115
    %133 = vmatpush.bf16.msra.mxu0 %v114
    %134 = vmatpush.bf16.msra.mxu0 %v113
    %135 = vmatpush.bf16.msra.mxu0 %v112
    %136 = vmatmul.bf16.gmra.mxu0 %v78
    %v137 = vpop.f32.mrf.mxu0
    %v138 = vadd.f32 %v72, %v137
    %v139 = vpop.f32.mrf.mxu0
    %v140 = vadd.f32 %v72, %v139
    %141 = vdwg.mxu0
    %v142 = vmul.f32 %v138, 0.5
    %v143 = vmul.f32 %v140, 0.5
    %v144 = vmul.f32 %v138, 0.70710677
    %v145 = vmul.f32 %v140, 0.70710677
    %v146 = vmul.f32 %v144, %v144
    %v147 = vmin.f32 16.0, %v146
    %v148 = vmul.f32 %v147, 2.1237322e-06
    %v149 = vadd.f32 %v148, 0.00028619796
    %v150 = vmul.f32 %v147, %v149
    %v151 = vadd.f32 %v150, 0.0036580483
    %v152 = vmul.f32 %v147, %v151
    %v153 = vadd.f32 %v152, 0.05243302
    %v154 = vmul.f32 %v147, %v153
    %v155 = vadd.f32 %v154, 0.18741608
    %v156 = vmul.f32 %v147, %v155
    %v157 = vadd.f32 %v156, 1.1283791
    %v158 = vmul.f32 %v144, %v157
    %v159 = vmul.f32 %v147, 3.8918573e-05
    %v160 = vadd.f32 %v159, 0.001143296
    %v161 = vmul.f32 %v147, %v160
    %v162 = vadd.f32 %v161, 0.014752088
    %v163 = vmul.f32 %v147, %v162
    %v164 = vadd.f32 %v163, 0.112945676
    %v165 = vmul.f32 %v147, %v164
    %v166 = vadd.f32 %v165, 0.4994258
    %v167 = vmul.f32 %v147, %v166
    %v168 = vadd.f32 %v167, 1.0
    %v169 = vrcp.pop %v168
    %v170 = vmul.f32 %v168, %v169
    %v171 = vsub.f32 1.0, %v170
    %v172 = vmul.f32 %v169, %v171
    %v173 = vadd.f32 %v169, %v172
    %vm174 = vweird.f32 %v168
    %vm175 = vweird.f32 %v169
    %vm176 = vmor %vm174, %vm175
    %v177 = vsel %vm176, %v169, %v173
    %v178 = vand.u32 2147483647, %v168
    %vm179 = vcmp.eq.f32.partialorder %v178, 8.507059e+37
    %v180 = vand.u32 %v168, 2147483648
    %v181 = vor.u32 1.1754944e-38, %v180
    %v182 = vsel %vm179, %v181, %v177
    %v183 = vmul.f32 %v158, %v182
    %v184 = vmin.f32 %v183, 1.0
    %v185 = vmax.f32 %v184, -1.0
    %v186 = vmul.f32 %v145, %v145
    %v187 = vmin.f32 16.0, %v186
    %v188 = vmul.f32 %v187, 2.1237322e-06
    %v189 = vadd.f32 %v188, 0.00028619796
    %v190 = vmul.f32 %v187, %v189
    %v191 = vadd.f32 %v190, 0.0036580483
    %v192 = vmul.f32 %v187, %v191
    %v193 = vadd.f32 %v192, 0.05243302
    %v194 = vmul.f32 %v187, %v193
    %v195 = vadd.f32 %v194, 0.18741608
    %v196 = vmul.f32 %v187, %v195
    %v197 = vadd.f32 %v196, 1.1283791
    %v198 = vmul.f32 %v145, %v197
    %v199 = vmul.f32 %v187, 3.8918573e-05
    %v200 = vadd.f32 %v199, 0.001143296
    %v201 = vmul.f32 %v187, %v200
    %v202 = vadd.f32 %v201, 0.014752088
    %v203 = vmul.f32 %v187, %v202
    %v204 = vadd.f32 %v203, 0.112945676
    %v205 = vmul.f32 %v187, %v204
    %v206 = vadd.f32 %v205, 0.4994258
    %v207 = vmul.f32 %v187, %v206
    %v208 = vadd.f32 %v207, 1.0
    %v209 = vrcp.pop %v208
    %v210 = vmul.f32 %v208, %v209
    %v211 = vsub.f32 1.0, %v210
    %v212 = vmul.f32 %v209, %v211
    %v213 = vadd.f32 %v209, %v212
    %vm214 = vweird.f32 %v208
    %vm215 = vweird.f32 %v209
    %vm216 = vmor %vm214, %vm215
    %v217 = vsel %vm216, %v209, %v213
    %v218 = vand.u32 2147483647, %v208
    %vm219 = vcmp.eq.f32.partialorder %v218, 8.507059e+37
    %v220 = vand.u32 %v208, 2147483648
    %v221 = vor.u32 1.1754944e-38, %v220
    %v222 = vsel %vm219, %v221, %v217
    %v223 = vmul.f32 %v198, %v222
    %v224 = vmin.f32 %v223, 1.0
    %v225 = vmax.f32 %v224, -1.0
    %v226 = vadd.f32 %v185, 1.0
    %v227 = vadd.f32 %v225, 1.0
    %v228 = vmul.f32 %v142, %v226
    %v229 = vmul.f32 %v143, %v227
    %v230 = vpack.c.bf16 %v229, %v228
    %v231 = vld [vmem:[#allocation5] sm:$0xf]
    %v232 = vld [vmem:[#allocation5 + $0x4] sm:$0xf]
    %v233 = vld [vmem:[#allocation5 + $0x8] sm:$0xf]
    %v234 = vld [vmem:[#allocation5 + $0xc] sm:$0xf]
    %v235 = vld [vmem:[#allocation5 + $0x10] sm:$0xf]
    %v236 = vld [vmem:[#allocation5 + $0x14] sm:$0xf]
    %v237 = vld [vmem:[#allocation5 + $0x18] sm:$0xf]
    %v238 = vld [vmem:[#allocation5 + $0x1c] sm:$0xf]
    %v239 = vld [vmem:[#allocation5 + $0x20] sm:$0xf]
    %v240 = vld [vmem:[#allocation5 + $0x24] sm:$0xf]
    %v241 = vld [vmem:[#allocation5 + $0x28] sm:$0xf]
    %v242 = vld [vmem:[#allocation5 + $0x2c] sm:$0xf]
    %v243 = vld [vmem:[#allocation5 + $0x30] sm:$0xf]
    %v244 = vld [vmem:[#allocation5 + $0x34] sm:$0xf]
    %v245 = vld [vmem:[#allocation5 + $0x38] sm:$0xf]
    %v246 = vld [vmem:[#allocation5 + $0x3c] sm:$0xf]
    %v263 = vunpack.c.l.b16 %v231
    %v264 = vunpack.c.l.b16 %v232
    %v265 = vunpack.c.l.b16 %v233
    %v266 = vunpack.c.l.b16 %v234
    %v267 = vunpack.c.l.b16 %v235
    %v268 = vunpack.c.l.b16 %v236
    %v269 = vunpack.c.l.b16 %v237
    %v270 = vunpack.c.l.b16 %v238
    %v271 = vunpack.c.l.b16 %v239
    %v272 = vunpack.c.l.b16 %v240
    %v273 = vunpack.c.l.b16 %v241
    %v274 = vunpack.c.l.b16 %v242
    %v275 = vunpack.c.l.b16 %v243
    %v276 = vunpack.c.l.b16 %v244
    %v277 = vunpack.c.l.b16 %v245
    %v278 = vunpack.c.l.b16 %v246
    %v279 = vpack.c.b16 %v264, %v263
    %v280 = vpack.c.b16 %v266, %v265
    %v281 = vpack.c.b16 %v268, %v267
    %v282 = vpack.c.b16 %v270, %v269
    %v283 = vpack.c.b16 %v272, %v271
    %v284 = vpack.c.b16 %v274, %v273
    %v285 = vpack.c.b16 %v276, %v275
    %v286 = vpack.c.b16 %v278, %v277
    %295 = vmatpush.bf16.msra.mxu0 %v286
    %296 = vmatpush.bf16.msra.mxu0 %v285
    %297 = vmatpush.bf16.msra.mxu0 %v284
    %298 = vmatpush.bf16.msra.mxu0 %v283
    %299 = vmatpush.bf16.msra.mxu0 %v282
    %300 = vmatpush.bf16.msra.mxu0 %v281
    %301 = vmatpush.bf16.msra.mxu0 %v280
    %302 = vmatpush.bf16.msra.mxu0 %v279
    %303 = vmatmul.bf16.gmra.mxu0 %v230
    %v304 = vpop.f32.mrf.mxu0
    %v305 = vadd.f32 0.0, %v304
    %v306 = vpop.f32.mrf.mxu0
    %v307 = vadd.f32 0.0, %v306
    %308 = vdwg.mxu0
    %p309 = scmp.eq.s32.totalorder 0, 0
    // Predicated region
    $region30: #{mlp_forward_prepared.1} parent=1 // pred_check
      %p310 = pneg %p309
    $region31: #{mlp_forward_prepared.1} parent=1 // pred_check_branch
      %312 = sbr.rel (%p310) target = $region33
    $region32: #{mlp_forward_prepared.1} parent=1 // pred_region
      %313 = vst [vmem:[#allocation2] sm:$0xff] %v305
      %314 = vst [vmem:[#allocation2 + $0x8] sm:$0xff] %v307
    $region33: #{mlp_forward_prepared.1} parent=1 // pred_fallthru
      _
    %p315 = scmp.gt.s32.totalorder 0, 0
    // Predicated region
    $region34: #{mlp_forward_prepared.1} parent=1 // pred_check
      %p316 = pneg %p315
    $region35: #{mlp_forward_prepared.1} parent=1 // pred_check_branch
      %318 = sbr.rel (%p316) target = $region37
    $region36: #{mlp_forward_prepared.1} parent=1 // pred_region
      %v319 = vld [vmem:[#allocation2] sm:$0xff]
      %v320 = vld [vmem:[#allocation2 + $0x8] sm:$0xff]
      %v321 = vadd.f32 %v319, %v305
      %v322 = vadd.f32 %v320, %v307
      %323 = vst [vmem:[#allocation2] sm:$0xff] %v321
      %324 = vst [vmem:[#allocation2 + $0x8] sm:$0xff] %v322
    $region37: #{mlp_forward_prepared.1} parent=1 // pred_fallthru
      _
    // Predicated region
    $region38: #{mlp_forward_prepared.1} parent=1 // pred_check
      %p325 = pneg %p309
    $region39: #{mlp_forward_prepared.1} parent=1 // pred_check_branch
      %327 = sbr.rel (%p325) target = $region41
    $region40: #{mlp_forward_prepared.1} parent=1 // pred_region
      %v328 = vld [vmem:[#allocation2] sm:$0xff]
      %v329 = vld [vmem:[#allocation2 + $0x8] sm:$0xff]
      %v330 = vld [vmem:[%s4] sm:$0x1]
      %v332 = vperm.slane %v330, 0
      %v334 = vadd.f32 %v328, %v332
      %v335 = vadd.f32 %v329, %v332
      %336 = vst [vmem:[%s5] sm:$0xff] %v334
      %337 = vst [vmem:[%s5 + $0x8] sm:$0xff] %v335
    $region41: #{mlp_forward_prepared.1} parent=1 // pred_fallthru
      _
    // Predicated region
    $region42: #{mlp_forward_prepared.1} parent=1 // pred_check
      _
    $region43: #{mlp_forward_prepared.1} parent=1 // pred_check_branch
      %339 = sbr.rel (0) target = $region45
    $region44: #{mlp_forward_prepared.1} parent=1 // pred_region
      _
    $region45: #{mlp_forward_prepared.1} parent=1 // pred_fallthru
      _
    // Predicated region
    $region46: #{mlp_forward_prepared.1} parent=1 // pred_check
      _
    $region47: #{mlp_forward_prepared.1} parent=1 // pred_check_branch
      %341 = sbr.rel (0) target = $region49
    $region48: #{mlp_forward_prepared.1} parent=1 // pred_region
      _
    $region49: #{mlp_forward_prepared.1} parent=1 // pred_fallthru
      _
    %342 = vsyncpa [#allocation4], 1
    %343 = vsyncpa [#allocation6], 1

</llo_original>
